<compile_context>
chip_gen: v6e
topology: v6e:2x2x1
jax: 0.10.0
libtpu: 0.0.40
codegen_flags: <defaults>
</compile_context>

<pallas_src>
import functools

import jax
import jax.numpy as jnp
from jax.experimental import pallas as pl
from jax.experimental.pallas import tpu as pltpu

_LANE = 128
_MAX_TILE_ROWS = 65536                      # keeps (1, tile_n) row temporaries small
_TARGET_C_BUF_BYTES = 16 * 1024 * 1024      # VMEM footprint target per c buffer


def _round_up(x, m):
    return ((x + m - 1) // m) * m


def _num_tensorcores():
    """Best-effort TensorCores-per-chip. Only affects performance, never correctness."""
    try:
        kind = jax.devices()[0].device_kind.lower()
    except Exception:
        return 1
    for tag in ("v4", "v5p", "v7", "7x"):
        if tag in kind:
            return 2
    return 1


def _choose_tile_n(n, d):
    # Size by VMEM footprint (lane dim padded to 128), multiple of 128 rows.
    d_pad = max(_LANE, _round_up(d, _LANE))
    t = _TARGET_C_BUF_BYTES // (4 * d_pad)
    t = max(_LANE, (t // _LANE) * _LANE)
    t = min(t, _MAX_TILE_ROWS)
    if n <= t:
        return n            # single chunk: block dims equal full array dims (always legal)
    return t


def _score_kernel(theta0_ref, bias_ref, c_ref, y_ref, acc_ref, *, n_rows, tile_n,
                  chunks_per_core):
    # theta0_ref: (1, D)  resident weights
    # bias_ref  : (1, 1)  resident hoisted sum(theta[1])
    # c_ref     : (tile_n, D) streamed tile
    # y_ref     : (1, tile_n) streamed lane-dense label row
    # acc_ref   : (1, 1, 1) output block, resident across the inner (reduction) axis
    p = pl.program_id(0)
    i = pl.program_id(1)

    @pl.when(i == 0)
    def _():
        acc_ref[...] = jnp.zeros_like(acc_ref)

    # z as a lane-dense (1, tile_n) row on the MXU (contraction on both last dims,
    # i.e. theta0 @ c^T, handled natively — no transpose copy of the c tile).
    z = jax.lax.dot_general(
        theta0_ref[...], c_ref[...],
        dimension_numbers=(((1,), (1,)), ((), ())),
        preferred_element_type=jnp.float32,
    ) + bias_ref[...]                                     # (1, tile_n)

    y = y_ref[...]                                        # (1, tile_n)
    # Stable BCE: y*log(sigmoid(z)) + (1-y)*log(1-sigmoid(z)) == y*z - softplus(z)
    sp = jnp.maximum(z, 0.0) + jnp.log1p(jnp.exp(-jnp.abs(z)))
    bce = y * z - sp                                      # (1, tile_n)

    chunk = p * chunks_per_core + i                       # UNCLAMPED chunk index
    row0 = chunk * tile_n
    ragged = row0 + tile_n > n_rows                       # ragged tail or duplicate iter

    @pl.when(jnp.logical_not(ragged))
    def _():
        acc_ref[...] += jnp.sum(bce)

    @pl.when(ragged)
    def _():
        cols = jax.lax.broadcasted_iota(jnp.int32, (1, tile_n), 1)
        valid = (row0 + cols) < n_rows
        acc_ref[...] += jnp.sum(jnp.where(valid, bce, 0.0))


def score(theta, c, output, *, tile_n=None):
    """theta: (2, D), c: (N, D), output: (N,) or (N, 1). Returns scalar BCE loss."""
    theta = jnp.asarray(theta, jnp.float32)
    c = jnp.asarray(c, jnp.float32)
    n, d = c.shape
    y = jnp.asarray(output, jnp.float32).reshape(1, n)    # lane-dense label row

    theta0 = theta[0:1, :]                                # (1, D) weights
    bias = jnp.sum(theta[1]).reshape(1, 1)                # hoisted sum_j theta[1, j]

    if tile_n is None:
        tile_n = _choose_tile_n(n, d)
    tile_n = int(tile_n)
    total_chunks = -(-n // tile_n)

    ncores = max(1, min(_num_tensorcores(), total_chunks))
    chunks_per_core = -(-total_chunks // ncores)
    last_chunk = total_chunks - 1

    # Clamp the block index (no wrapper-side padding of c/y); the kernel's row mask
    # uses the unclamped chunk id so duplicate / ragged rows contribute exactly 0.
    def c_map(p, i):
        return (jnp.minimum(p * chunks_per_core + i, last_chunk), 0)

    def y_map(p, i):
        return (0, jnp.minimum(p * chunks_per_core + i, last_chunk))

    # VMEM budget: double-buffered c/y tiles + resident theta + row temporaries + margin.
    d_pad = max(_LANE, _round_up(d, _LANE))
    tn_pad = max(_LANE, _round_up(tile_n, _LANE))
    c_buf = _round_up(tile_n, 8) * d_pad * 4
    row_buf = 8 * tn_pad * 4                              # (1, tile_n) sublane-padded
    working = 2 * c_buf + 2 * row_buf + 8 * row_buf + 4 * 8 * d_pad * 4 + (4 << 20)
    vmem_bytes = int(min(48 << 20, max(16 << 20, working)))

    kernel = functools.partial(_score_kernel, n_rows=n, tile_n=tile_n,
                               chunks_per_core=chunks_per_core)

    partials = pl.pallas_call(
        kernel,
        out_shape=jax.ShapeDtypeStruct((ncores, 1, 1), jnp.float32),
        grid=(ncores, chunks_per_core),
        in_specs=[
            pl.BlockSpec((1, d), lambda p, i: (0, 0)),    # theta0 (resident)
            pl.BlockSpec((1, 1), lambda p, i: (0, 0)),    # bias   (resident)
            pl.BlockSpec((tile_n, d), c_map),             # c tile
            pl.BlockSpec((1, tile_n), y_map),             # y tile (lane-dense)
        ],
        out_specs=pl.BlockSpec((1, 1, 1), lambda p, i: (p, 0, 0)),
        compiler_params=pltpu.CompilerParams(
            dimension_semantics=("parallel", "arbitrary"),
            vmem_limit_bytes=vmem_bytes),
        cost_estimate=pl.CostEstimate(
            flops=2 * n * d + 8 * n,
            transcendentals=2 * n,
            bytes_accessed=4 * (n * d + n + d + 1 + ncores)),
    )(theta0, bias, c, y)

    # Final reduction over per-core partial sums + mean + negation (scalar work).
    return -jnp.sum(partials) / jnp.float32(n)


if __name__ == "__main__":
    def _reference(theta, c, output):
        # Direct transcription of the PyTorch module.
        z = jnp.sum(theta[0] * c + theta[1], axis=1)
        p = 1.0 / (1.0 + jnp.exp(-z))
        return -jnp.mean(output * jnp.log(p) + (1.0 - output) * jnp.log(1.0 - p))

    def _case(key, n, d, **kw):
        k1, k2, k3 = jax.random.split(key, 3)
        theta = jax.random.normal(k1, (2, d), dtype=jnp.float32) * 0.1
        c = jax.random.normal(k2, (n, d), dtype=jnp.float32)
        y = jax.random.bernoulli(k3, 0.5, (n,)).astype(jnp.float32)
        out = score(theta, c, y, **kw)
        jax.block_until_ready(out)
        ref = _reference(theta, c, y)
        assert jnp.allclose(out, ref, rtol=1e-4, atol=1e-5), (n, d, kw, out, ref)

    keys = jax.random.split(jax.random.PRNGKey(0), 4)
    _case(keys[0], 8, 32)                    # module-scale small case, single tile
    _case(keys[1], 300, 256)                 # single tile, row count not a multiple of 8
    _case(keys[2], 300, 256, tile_n=128)     # multi-chunk + ragged tail + clamped dup iter
    _case(keys[3], 4096, 128, tile_n=512)    # multi-chunk, evenly divisible, 2-core split

    print("KERNEL_OK")
</pallas_src>

<mosaic_0001>
module attributes {stable_mosaic.version = 11 : i64} {
  func.func @_score_kernel(%arg0: i32, %arg1: i32, %arg2: memref<1x32xf32, #tpu.memory_space<vmem>>, %arg3: memref<1x1xf32, #tpu.memory_space<vmem>>, %arg4: memref<8x32xf32, #tpu.memory_space<vmem>>, %arg5: memref<1x8xf32, #tpu.memory_space<vmem>>, %arg6: memref<1x1x1xf32, #tpu.memory_space<vmem>>) attributes {dimension_semantics = [#tpu.dimension_semantics<parallel>, #tpu.dimension_semantics<arbitrary>], iteration_bounds = array<i64: 1, 1>, scalar_prefetch = 0 : i64, scratch_operands = 0 : i64, tpu.core_type = #tpu.core_type<tc>, window_params = [{pipeline_mode = #tpu.pipeline_mode<synchronous>, transform_indices = @transform_0, window_bounds = array<i64: 1, 32>}, {pipeline_mode = #tpu.pipeline_mode<synchronous>, transform_indices = @transform_1, window_bounds = array<i64: 1, 1>}, {transform_indices = @transform_2, window_bounds = array<i64: 8, 32>}, {transform_indices = @transform_3, window_bounds = array<i64: 1, 8>}, {transform_indices = @transform_4, window_bounds = array<i64: 1, 1, 1>}]} {
    %c0_i32 = arith.constant 0 : i32
    %0 = arith.cmpi eq, %arg1, %c0_i32 : i32
    %1 = arith.extui %0 : i1 to i32
    %c0_i32_0 = arith.constant 0 : i32
    %2 = arith.cmpi ne, %1, %c0_i32_0 : i32
    scf.if %2 {
      %cst_14 = arith.constant 0.000000e+00 : f32
      %30 = vector.broadcast %cst_14 : f32 to vector<1x1x1xf32>
      %c0_15 = arith.constant 0 : index
      %c0_16 = arith.constant 0 : index
      %c0_17 = arith.constant 0 : index
      %31 = vector.load %arg6[%c0_15, %c0_16, %c0_17] : memref<1x1x1xf32, #tpu.memory_space<vmem>>, vector<1x1x1xf32>
      tpu.vector_store %arg6[%c0_15, %c0_16, %c0_17], %30 {strides = array<i32>} : memref<1x1x1xf32, #tpu.memory_space<vmem>>, vector<1x1x1xf32>,
    } else {
    }
    %c0 = arith.constant 0 : index
    %c0_1 = arith.constant 0 : index
    %3 = vector.load %arg2[%c0, %c0_1] : memref<1x32xf32, #tpu.memory_space<vmem>>, vector<1x32xf32>
    %c0_2 = arith.constant 0 : index
    %c0_3 = arith.constant 0 : index
    %4 = vector.load %arg4[%c0_2, %c0_3] : memref<8x32xf32, #tpu.memory_space<vmem>>, vector<8x32xf32>
    %cst = arith.constant dense<0.000000e+00> : vector<1x8xf32>
    %5 = tpu.matmul %3, %4, %cst {dimension_numbers = #tpu.dot_dimension_numbers<[1], [1], [0], [0], [0, 0, 1, 0], [], []>} : vector<1x32xf32>, vector<8x32xf32>, vector<1x8xf32> -> vector<1x8xf32>
    %c0_4 = arith.constant 0 : index
    %c0_5 = arith.constant 0 : index
    %6 = vector.load %arg3[%c0_4, %c0_5] : memref<1x1xf32, #tpu.memory_space<vmem>>, vector<1x1xf32>
    %7 = vector.broadcast %6 : vector<1x1xf32> to vector<1x8xf32>
    %8 = arith.addf %5, %7 : vector<1x8xf32>
    %c0_6 = arith.constant 0 : index
    %c0_7 = arith.constant 0 : index
    %9 = vector.load %arg5[%c0_6, %c0_7] : memref<1x8xf32, #tpu.memory_space<vmem>>, vector<1x8xf32>
    %cst_8 = arith.constant 0.000000e+00 : f32
    %10 = vector.broadcast %cst_8 : f32 to vector<1x8xf32>
    %11 = arith.maximumf %8, %10 : vector<1x8xf32>
    %12 = math.absf %8 : vector<1x8xf32>
    %cst_9 = arith.constant 0.000000e+00 : f32
    %13 = vector.broadcast %cst_9 : f32 to vector<1x8xf32>
    %14 = arith.subf %13, %12 : vector<1x8xf32>
    %15 = math.exp %14 : vector<1x8xf32>
    %16 = math.log1p %15 : vector<1x8xf32>
    %17 = arith.addf %11, %16 : vector<1x8xf32>
    %18 = arith.mulf %9, %8 : vector<1x8xf32>
    %19 = arith.subf %18, %17 : vector<1x8xf32>
    %c1_i32 = arith.constant 1 : i32
    %20 = arith.muli %arg0, %c1_i32 : i32
    %21 = arith.addi %20, %arg1 : i32
    %c8_i32 = arith.constant 8 : i32
    %22 = arith.muli %21, %c8_i32 : i32
    %c8_i32_10 = arith.constant 8 : i32
    %23 = arith.addi %22, %c8_i32_10 : i32
    %c8_i32_11 = arith.constant 8 : i32
    %24 = arith.cmpi sgt, %23, %c8_i32_11 : i32
    %true = arith.constant true
    %25 = arith.xori %24, %true : i1
    %26 = arith.extui %25 : i1 to i32
    %c0_i32_12 = arith.constant 0 : i32
    %27 = arith.cmpi ne, %26, %c0_i32_12 : i32
    scf.if %27 {
      %c0_14 = arith.constant 0 : index
      %c0_15 = arith.constant 0 : index
      %c0_16 = arith.constant 0 : index
      %30 = vector.load %arg6[%c0_14, %c0_15, %c0_16] : memref<1x1x1xf32, #tpu.memory_space<vmem>>, vector<1x1x1xf32>
      %31 = vector.shape_cast %19 : vector<1x8xf32> to vector<1x1x8xf32>
      %cst_17 = arith.constant dense<0.000000e+00> : vector<1xf32>
      %32 = vector.multi_reduction <add>, %31, %cst_17 [1, 2] : vector<1x1x8xf32> to vector<1xf32>
      %33 = vector.shape_cast %32 : vector<1xf32> to vector<1x1x1xf32>
      %34 = vector.extract %33[0, 0, 0] : f32 from vector<1x1x1xf32>
      %35 = vector.broadcast %34 : f32 to vector<1x1x1xf32>
      %36 = arith.addf %30, %35 : vector<1x1x1xf32>
      %c0_18 = arith.constant 0 : index
      %c0_19 = arith.constant 0 : index
      %c0_20 = arith.constant 0 : index
      %37 = vector.load %arg6[%c0_18, %c0_19, %c0_20] : memref<1x1x1xf32, #tpu.memory_space<vmem>>, vector<1x1x1xf32>
      tpu.vector_store %arg6[%c0_18, %c0_19, %c0_20], %36 {strides = array<i32>} : memref<1x1x1xf32, #tpu.memory_space<vmem>>, vector<1x1x1xf32>,
    } else {
    }
    %28 = arith.extui %24 : i1 to i32
    %c0_i32_13 = arith.constant 0 : i32
    %29 = arith.cmpi ne, %28, %c0_i32_13 : i32
    scf.if %29 {
      %30 = tpu.iota {dimensions = array<i32: 1>} : vector<1x8xi32>
      %31 = vector.broadcast %22 : i32 to vector<1x8xi32>
      %32 = arith.addi %31, %30 : vector<1x8xi32>
      %c8_i32_14 = arith.constant 8 : i32
      %33 = vector.broadcast %c8_i32_14 : i32 to vector<1x8xi32>
      %34 = arith.cmpi slt, %32, %33 : vector<1x8xi32>
      %c0_15 = arith.constant 0 : index
      %c0_16 = arith.constant 0 : index
      %c0_17 = arith.constant 0 : index
      %35 = vector.load %arg6[%c0_15, %c0_16, %c0_17] : memref<1x1x1xf32, #tpu.memory_space<vmem>>, vector<1x1x1xf32>
      %cst_18 = arith.constant 0.000000e+00 : f32
      %36 = vector.broadcast %cst_18 : f32 to vector<1x8xf32>
      %37 = arith.select %34, %19, %36 : vector<1x8xi1>, vector<1x8xf32>
      %38 = vector.shape_cast %37 : vector<1x8xf32> to vector<1x1x8xf32>
      %cst_19 = arith.constant dense<0.000000e+00> : vector<1xf32>
      %39 = vector.multi_reduction <add>, %38, %cst_19 [1, 2] : vector<1x1x8xf32> to vector<1xf32>
      %40 = vector.shape_cast %39 : vector<1xf32> to vector<1x1x1xf32>
      %41 = vector.extract %40[0, 0, 0] : f32 from vector<1x1x1xf32>
      %42 = vector.broadcast %41 : f32 to vector<1x1x1xf32>
      %43 = arith.addf %35, %42 : vector<1x1x1xf32>
      %c0_20 = arith.constant 0 : index
      %c0_21 = arith.constant 0 : index
      %c0_22 = arith.constant 0 : index
      %44 = vector.load %arg6[%c0_20, %c0_21, %c0_22] : memref<1x1x1xf32, #tpu.memory_space<vmem>>, vector<1x1x1xf32>
      tpu.vector_store %arg6[%c0_20, %c0_21, %c0_22], %43 {strides = array<i32>} : memref<1x1x1xf32, #tpu.memory_space<vmem>>, vector<1x1x1xf32>,
    } else {
    }
    return
  }
  func.func @transform_0(%arg0: i32, %arg1: i32) -> (i32, i32) {
    %c0_i32 = arith.constant 0 : i32
    %c0_i32_0 = arith.constant 0 : i32
    %c0_i32_1 = arith.constant 0 : i32
    return %c0_i32, %c0_i32_0 : i32, i32
  }
  func.func @transform_1(%arg0: i32, %arg1: i32) -> (i32, i32) {
    %c0_i32 = arith.constant 0 : i32
    %c0_i32_0 = arith.constant 0 : i32
    %c0_i32_1 = arith.constant 0 : i32
    return %c0_i32, %c0_i32_0 : i32, i32
  }
  func.func @transform_2(%arg0: i32, %arg1: i32) -> (i32, i32) {
    %c1_i32 = arith.constant 1 : i32
    %0 = arith.muli %arg0, %c1_i32 : i32
    %1 = arith.addi %0, %arg1 : i32
    %c0_i32 = arith.constant 0 : i32
    %2 = arith.minsi %1, %c0_i32 : i32
    %c0_i32_0 = arith.constant 0 : i32
    %c0_i32_1 = arith.constant 0 : i32
    return %2, %c0_i32_0 : i32, i32
  }
  func.func @transform_3(%arg0: i32, %arg1: i32) -> (i32, i32) {
    %c1_i32 = arith.constant 1 : i32
    %0 = arith.muli %arg0, %c1_i32 : i32
    %1 = arith.addi %0, %arg1 : i32
    %c0_i32 = arith.constant 0 : i32
    %2 = arith.minsi %1, %c0_i32 : i32
    %c0_i32_0 = arith.constant 0 : i32
    %c0_i32_1 = arith.constant 0 : i32
    return %c0_i32_0, %2 : i32, i32
  }
  func.func @transform_4(%arg0: i32, %arg1: i32) -> (i32, i32, i32) {
    %c0_i32 = arith.constant 0 : i32
    %c0_i32_0 = arith.constant 0 : i32
    %c0_i32_1 = arith.constant 0 : i32
    return %arg0, %c0_i32, %c0_i32_0 : i32, i32, i32
  }
}

</mosaic_0001>

<llo_original>
// kernel: tpu_custom_call.1
$region0: #{tpu_custom_call.1}
  #allocation0 [shape = 'u32[]', space=smem, size = 0x4, offset = 0x4, fixed_abs, tag = 'smem constant byte address 0x4 - core index']
  #allocation1 [shape = 'u32[144,128]{1,0:T(1,128)}', space=vmem, size = 0x12000, scoped, tag = 'internal scratch']
  #allocation2 [shape = 'f32[1,1]{1,0:T(1,128)S(1)}', space=vmem, size = 0x200, scoped, tag = 'scoped memory for tpu_custom_call.1']
  %s0 = inlined_call_operand.vmem [shape: f32[1,32], index: 0, kind: input, shape index: {}]
  %s1 = inlined_call_operand.<no memory space> [shape: f32[1,1], index: 1, kind: input, shape index: {}]
  %s2 = inlined_call_operand.hbm [shape: f32[8,32], index: 2, kind: input, shape index: {}]
  %s3 = inlined_call_operand.vmem [shape: f32[1,8], index: 3, kind: input, shape index: {}]
  %s4 = inlined_call_operand.hbm [shape: f32[1,1,1], index: 4, kind: output, shape index: {}]
  %s5 = sld [smem:[#allocation0]]
  $region42: #{tpu_custom_call.1} parent=0
    _
  %s7 = ssub.s32 1, %s5
  %s8 = scalar_select 0, %s7, %s5
  %v9 = vstv %s1
  %10 = vst [vmem:[#allocation2] sm:$0x1] %v9
  $region1: #{tpu_custom_call.1} parent=0
    #allocation3 [shape = 'u8[4096]{0}', space=vmem, size = 0x1000, scoped, tag = 'input window, operand 2, single buffered']
    #allocation4 [shape = 's32[1]{0}', space=sflag, size = 0x4, scoped, tag = 'scoped memory for tpu_custom_call.1']
    #allocation5 [shape = 's32[1]{0}', space=sflag, size = 0x4, scoped, tag = 'scoped memory for tpu_custom_call.1']
    #allocation6 [shape = 'u8[512]{0}', space=vmem, size = 0x400, scoped, tag = 'output window, operand 0, single buffered']
    %11 = vsyncpa [#allocation4], 0
    %12 = vsyncpa [#allocation5], 0
    // Predicated region
    $region2: #{tpu_custom_call.1} parent=1 // pred_check
      _
    $region3: #{tpu_custom_call.1} parent=1 // pred_check_branch
      %14 = sbr.rel (0) target = $region5
    $region4: #{tpu_custom_call.1} parent=1 // pred_region
      _
    $region5: #{tpu_custom_call.1} parent=1 // pred_fallthru
      _
    // Predicated region
    $region6: #{tpu_custom_call.1} parent=1 // pred_check
      _
    $region7: #{tpu_custom_call.1} parent=1 // pred_check_branch
      %16 = sbr.rel (0) target = $region9
    $region8: #{tpu_custom_call.1} parent=1 // pred_region
      _
    $region9: #{tpu_custom_call.1} parent=1 // pred_fallthru
      _
    // Predicated region
    $region10: #{tpu_custom_call.1} parent=1 // pred_check
      _
    $region11: #{tpu_custom_call.1} parent=1 // pred_check_branch
      %18 = sbr.rel (0) target = $region13
    $region12: #{tpu_custom_call.1} parent=1 // pred_region
      %s19 = sadd.s32 0, 0
      %p20 = scmp.lt.s32.totalorder %s19, 0
      %s21 = scalar_select %p20, %s19, 0
      %s23 = ssub.s32 128, 128
      %24 = vsyncadd [#allocation4], %s23
      %s25 = smul.addr %s21, 128
      %s26 = scalar_lea.hbm %s2, %s25
      %s28 = sshll.u32 [#allocation3], 4
      %s29 = int_to_ptr.vmem [resolvable:$true] %s28
      %31 = dma.hbm_to_vmem [thread:$0]  %s26, 128, %s29, [#allocation4]
    $region13: #{tpu_custom_call.1} parent=1 // pred_fallthru
      _
    // Predicated region
    $region14: #{tpu_custom_call.1} parent=1 // pred_check
      _
    $region15: #{tpu_custom_call.1} parent=1 // pred_check_branch
      %33 = sbr.rel (0) target = $region17
    $region16: #{tpu_custom_call.1} parent=1 // pred_region
      %s34 = sadd.s32 0, 0
      %p35 = scmp.lt.s32.totalorder %s34, 0
      %s36 = scalar_select %p35, %s34, 0
      %p37 = scmp.lt.s32.totalorder %s36, 0
      %s38 = scalar_select %p37, %s36, 0
      %s39 = scalar_lea.vmem %s3, %s38
      %s40 = sadd.s32 0, 0
      %p41 = scmp.lt.s32.totalorder %s40, 0
      %s42 = scalar_select %p41, %s40, 0
    $region17: #{tpu_custom_call.1} parent=1 // pred_fallthru
      _
    // Predicated region
    $region18: #{tpu_custom_call.1} parent=1 // pred_check
      _
    $region19: #{tpu_custom_call.1} parent=1 // pred_check_branch
      %44 = sbr.rel (0) target = $region21
    $region20: #{tpu_custom_call.1} parent=1 // pred_region
      %45 = dma.done [#allocation4], 128
    $region21: #{tpu_custom_call.1} parent=1 // pred_fallthru
      _
    %s46 = sadd.s32 0, 0
    %p47 = scmp.lt.s32.totalorder %s46, 0
    %s48 = scalar_select %p47, %s46, 0
    %p49 = scmp.lt.s32.totalorder %s48, 0
    %s50 = scalar_select %p49, %s48, 0
    %s51 = scalar_lea.vmem %s3, %s50
    %s52 = sadd.s32 0, 0
    %p53 = scmp.lt.s32.totalorder %s52, 0
    %s54 = scalar_select %p53, %s52, 0
    %s55 = sadd.s32 0, 0
    %p56 = scmp.lt.s32.totalorder %s55, 0
    %s57 = scalar_select %p56, %s55, 0
    %p58 = scmp.lt.s32.totalorder %s57, 0
    %s59 = scalar_select %p58, %s57, 0
    %s60 = scalar_lea.vmem %s3, %s59
    %s61 = sadd.s32 0, 0
    %p62 = scmp.lt.s32.totalorder %s61, 0
    %s63 = scalar_select %p62, %s61, 0
    %p64 = scmp.eq.s32.totalorder 0, 0
    // Predicated region
    $region22: #{tpu_custom_call.1} parent=1 // pred_check
      %p65 = pneg %p64
    $region23: #{tpu_custom_call.1} parent=1 // pred_check_branch
      %67 = sbr.rel (%p65) target = $region25
    $region24: #{tpu_custom_call.1} parent=1 // pred_region
      %vm68 = vcmask 0
      %69 = vst.msk [vmem:[#allocation6] sm:$0x1] %vm68, 0.0
    $region25: #{tpu_custom_call.1} parent=1 // pred_fallthru
      _
    %v70 = vld [vmem:[%s0] sm:$0x1]
    %v71 = vld [vmem:[#allocation3] sm:$0xff]
    %v72 = vld [vmem:[#allocation2] sm:$0x1]
    %74 = vset.pattern.permute.xlu0 0
    %75 = vperm.xlu0 %74, %v72
    %v76 = vpop.permute.xlu0 %75
    %v78 = vlaneseq
    %v79 = vshrl.u32 %v78, 7
    %v80 = vsub.s32 0, %v79
    %v81 = vrot.slane %v76, %v80
    %vm82 = vcmask 261120
    %v84 = vsel %vm82, %v70, 0
    %v87 = vsel %vm82, %v71, 0
    %89 = vmatprep.subr.mxu0 0.0
    %90 = vmatpush1.xpose.msra.mxu0 0.0
    %91 = vmatprep.subr.mxu0 0.0
    %92 = vmatpush1.xpose.msra.mxu0 0.0
    %93 = vmatprep.subr.mxu0 0.0
    %94 = vmatpush1.xpose.msra.mxu0 0.0
    %95 = vmatprep.subr.mxu0 0.0
    %96 = vmatpush1.xpose.msra.mxu0 0.0
    %97 = vmatprep.subr.mxu0 0.0
    %98 = vmatpush1.xpose.msra.mxu0 0.0
    %99 = vmatprep.subr.mxu0 0.0
    %100 = vmatpush1.xpose.msra.mxu0 0.0
    %101 = vmatprep.subr.mxu0 0.0
    %102 = vmatpush1.xpose.msra.mxu0 0.0
    %103 = vmatprep.subr.mxu0 0.0
    %104 = vmatpush1.xpose.msra.mxu0 0.0
    %105 = vmatprep.subr.mxu0 0.0
    %106 = vmatpush1.xpose.msra.mxu0 0.0
    %107 = vmatprep.subr.mxu0 0.0
    %108 = vmatpush1.xpose.msra.mxu0 0.0
    %109 = vmatprep.subr.mxu0 0.0
    %110 = vmatpush1.xpose.msra.mxu0 0.0
    %111 = vmatprep.subr.mxu0 0.0
    %112 = vmatpush1.xpose.msra.mxu0 0.0
    %113 = vmatprep.subr.mxu0 0.0
    %114 = vmatpush1.xpose.msra.mxu0 0.0
    %115 = vmatprep.subr.mxu0 0.0
    %116 = vmatpush1.xpose.msra.mxu0 0.0
    %117 = vmatprep.subr.mxu0 0.0
    %118 = vmatpush1.xpose.msra.mxu0 0.0
    %119 = vmatprep.subr.mxu0 0.0
    %120 = vmatpush1.xpose.msra.mxu0 %v87
    %121 = vmatprep.subr.mxu0 0.0
    %122 = vmatpush2.xpose.msra.mxu0 0.0
    %123 = vmatprep.subr.mxu0 0.0
    %124 = vmatpush2.xpose.msra.mxu0 0.0
    %125 = vmatprep.subr.mxu0 0.0
    %126 = vmatpush2.xpose.msra.mxu0 0.0
    %127 = vmatprep.subr.mxu0 0.0
    %128 = vmatpush2.xpose.msra.mxu0 0.0
    %129 = vmatprep.subr.mxu0 0.0
    %130 = vmatpush2.xpose.msra.mxu0 0.0
    %131 = vmatprep.subr.mxu0 0.0
    %132 = vmatpush2.xpose.msra.mxu0 0.0
    %133 = vmatprep.subr.mxu0 0.0
    %134 = vmatpush2.xpose.msra.mxu0 0.0
    %135 = vmatprep.subr.mxu0 0.0
    %136 = vmatpush2.xpose.msra.mxu0 0.0
    %137 = vmatprep.subr.mxu0 0.0
    %138 = vmatpush2.xpose.msra.mxu0 0.0
    %139 = vmatprep.subr.mxu0 0.0
    %140 = vmatpush2.xpose.msra.mxu0 0.0
    %141 = vmatprep.subr.mxu0 0.0
    %142 = vmatpush2.xpose.msra.mxu0 0.0
    %143 = vmatprep.subr.mxu0 0.0
    %144 = vmatpush2.xpose.msra.mxu0 0.0
    %145 = vmatprep.subr.mxu0 0.0
    %146 = vmatpush2.xpose.msra.mxu0 0.0
    %147 = vmatprep.subr.mxu0 0.0
    %148 = vmatpush2.xpose.msra.mxu0 0.0
    %149 = vmatprep.subr.mxu0 0.0
    %150 = vmatpush2.xpose.msra.mxu0 0.0
    %151 = vmatprep.subr.mxu0 0.0
    %152 = vmatpush2.xpose.msra.mxu0 0.0
    %153 = vmatprep.mubr.f32.mxu0 0.0
    %154 = vmatmul.mubr.f32.gmra.mxu0 %v84
    %v155 = vpop.f32.mrf.mxu0
    %v156 = vadd.f32 %v81, %v155
    %v157 = vpop.f32.mrf.mxu0
    %158 = vdwg.mxu0
    %v159 = vld [vmem:[%s60] sm:$0x1]
    %v160 = vmax.f32 %v156, 0.0
    %v161 = vand.u32 2147483647, %v156
    %v162 = vsub.f32 0.0, %v161
    %v163 = vmul.f32 %v162, 1.442695
    %v164 = vpow.pop %v163
    %v165 = vadd.f32 %v164, 1.0
    %v166 = vlog2.pop %v165
    %v167 = vmul.f32 %v166, 0.6931472
    %v168 = vmul.f32 -0.5, %v164
    %v169 = vadd.f32 %v168, 1.0
    %v170 = vmul.f32 %v169, %v164
    %v171 = vand.u32 2147483647, %v164
    %vm172 = vcmp.lt.f32.partialorder %v171, 0.0004427343
    %v173 = vsel %vm172, %v170, %v167
    %v174 = vadd.f32 %v160, %v173
    %v175 = vmul.f32 %v159, %v156
    %v176 = vsub.f32 %v175, %v174
    %s177 = sadd.s32 0, 0
    %s178 = smul.u32 %s177, 8
    %s179 = sadd.s32 %s178, 8
    %p180 = scmp.gt.s32.totalorder %s179, 8
    %p181 = scmp.le.s32.totalorder %s179, 8
    // Predicated region
    $region26: #{tpu_custom_call.1} parent=1 // pred_check
      %p182 = pneg %p181
    $region27: #{tpu_custom_call.1} parent=1 // pred_check_branch
      %184 = sbr.rel (%p182) target = $region29
    $region28: #{tpu_custom_call.1} parent=1 // pred_region
      %v185 = vld [vmem:[#allocation6] sm:$0x1]
      %vm186 = vcmask 57344
      %v187 = vsel %vm186, %v176, 0.0
      %188 = vadd.xlane.f32.xlu0 %v187
      %v189 = vpop.xlane.xlu0 %188
      %v190 = vrot.slane %v189, 4
      %v191 = vadd.f32 %v189, %v190
      %v192 = vrot.slane %v191, 2
      %v193 = vadd.f32 %v191, %v192
      %v194 = vrot.slane %v193, 1
      %v195 = vadd.f32 %v193, %v194
      %s196 = vtos %v195
      %v197 = vstv %s196
      %v198 = vadd.f32 %v185, %v197
      %vm199 = vcmask 0
      %200 = vst.msk [vmem:[#allocation6] sm:$0x1] %vm199, %v198
    $region29: #{tpu_custom_call.1} parent=1 // pred_fallthru
      _
    // Predicated region
    $region30: #{tpu_custom_call.1} parent=1 // pred_check
      %p201 = pneg %p180
    $region31: #{tpu_custom_call.1} parent=1 // pred_check_branch
      %203 = sbr.rel (%p201) target = $region33
    $region32: #{tpu_custom_call.1} parent=1 // pred_region
      %v204 = vlaneseq
      %v205 = vand.u32 %v204, 127
      %v206 = vstv %s178
      %v207 = vadd.s32 %v206, %v205
      %vm208 = vcmp.lt.s32.totalorder %v207, 8
      %v209 = vld [vmem:[#allocation6] sm:$0x1]
      %v210 = vsel %vm208, %v176, 0.0
      %vm211 = vcmask 57344
      %v212 = vsel %vm211, %v210, 0.0
      %213 = vadd.xlane.f32.xlu0 %v212
      %v214 = vpop.xlane.xlu0 %213
      %v215 = vrot.slane %v214, 4
      %v216 = vadd.f32 %v214, %v215
      %v217 = vrot.slane %v216, 2
      %v218 = vadd.f32 %v216, %v217
      %v219 = vrot.slane %v218, 1
      %v220 = vadd.f32 %v218, %v219
      %s221 = vtos %v220
      %v222 = vstv %s221
      %v223 = vadd.f32 %v209, %v222
      %vm224 = vcmask 0
      %225 = vst.msk [vmem:[#allocation6] sm:$0x1] %vm224, %v223
    $region33: #{tpu_custom_call.1} parent=1 // pred_fallthru
      _
    // Predicated region
    $region34: #{tpu_custom_call.1} parent=1 // pred_check
      _
    $region35: #{tpu_custom_call.1} parent=1 // pred_check_branch
      %227 = sbr.rel (0) target = $region37
    $region36: #{tpu_custom_call.1} parent=1 // pred_region
      %s229 = ssub.s32 16, 16
      %230 = vsyncadd [#allocation5], %s229
      %s232 = sshll.u32 [#allocation6], 4
      %s233 = int_to_ptr.vmem [resolvable:$true] %s232
      %235 = dma.vmem_to_hbm [thread:$0]  %s233, 16, %s4, [#allocation5]
    $region37: #{tpu_custom_call.1} parent=1 // pred_fallthru
      _
    // Predicated region
    $region38: #{tpu_custom_call.1} parent=1 // pred_check
      _
    $region39: #{tpu_custom_call.1} parent=1 // pred_check_branch
      %237 = sbr.rel (0) target = $region41
    $region40: #{tpu_custom_call.1} parent=1 // pred_region
      %238 = dma.done [#allocation5], 16
    $region41: #{tpu_custom_call.1} parent=1 // pred_fallthru
      _
    %239 = vsyncpa [#allocation4], 1
    %240 = vsyncpa [#allocation5], 1

</llo_original>
